<compile_context>
chip_gen: v7x
topology: tpu7x:2x2x1
jax: 0.10.0
libtpu: 0.0.40
codegen_flags: <defaults>
</compile_context>

<pallas_src>
import functools

import jax
import jax.numpy as jnp
from jax.experimental import pallas as pl
from jax.experimental.pallas import tpu as pltpu

_DEFAULT_VMEM_BYTES = 64 * 1024 * 1024  # conservative (v7x per-core size)


def _vmem_capacity_bytes():
    try:
        return int(pltpu.get_tpu_info().vmem_capacity_bytes)
    except Exception:
        return _DEFAULT_VMEM_BYTES


def _plan(nc, h, w, itemsize, budget_override=None):
    """Pick (planes per block P, padded NC, flattened-HW chunk size)."""
    hw = h * w
    packing = max(8, 32 // itemsize)              # sublane packing: 8 f32 / 16 bf16 / 32 i8
    if budget_override is not None:
        budget = int(budget_override)
    else:
        # ~70 MiB on v5e/v6e (128 MiB VMEM), ~35 MiB on v7x (64 MiB VMEM).
        budget = min(int(_vmem_capacity_bytes() * 0.55), 72 * 1024 * 1024)
    per_plane = 2 * itemsize * hw                 # double-buffered input only

    p_fit = budget // per_plane
    if p_fit >= nc:
        # One block covers all planes (full-dim block is always legal).
        p, chw = nc, hw
    elif p_fit >= packing:
        # Many planes per block; balance block count to minimize zero-padding.
        p_allowed = (p_fit // packing) * packing
        nblocks = -(-nc // p_allowed)
        p = -(-nc // nblocks)
        p = ((p + packing - 1) // packing) * packing
        chw = hw
    else:
        # Huge image: also tile the flattened H*W axis.  Chunks are whole
        # image rows (multiples of W) that divide H exactly, so only a 1-row
        # carry is needed and no column padding is ever read.
        p = min(packing, nc)
        k_max = max(1, budget // (2 * itemsize * p * w))
        k_any, k_aligned = 1, 0
        for cand in range(min(k_max, h), 0, -1):
            if h % cand:
                continue
            if k_any == 1:
                k_any = cand
            if (cand * w) % 128 == 0:
                k_aligned = cand
                break
        k = k_aligned if k_aligned else k_any
        chw = k * w
        # TODO(synk): if H is prime and a single (packing, W) row-block still
        # exceeds the budget, this plan can overshoot VMEM for absurd widths.
    nc_pad = ((nc + p - 1) // p) * p
    return p, nc_pad, chw


def _tv_kernel(x_ref, wmask_ref, hpart_ref, wpart_ref, carry_ref, *, w, multi_chunk):
    j = pl.program_id(1)  # chunk index along flattened H*W (innermost, sequential)

    @pl.when(j == 0)
    def _init():
        hpart_ref[...] = jnp.zeros_like(hpart_ref)
        wpart_ref[...] = jnp.zeros_like(wpart_ref)

    x = x_ref[...].astype(jnp.float32)            # (P, chw), lane-dense

    # H-direction diffs fully inside this chunk: x[p, pos+w] - x[p, pos].
    dh = x[:, w:] - x[:, :-w]                     # (P, chw - w)
    s_h = jnp.sum(dh * dh)

    # W-direction diffs: x[p, pos+1] - x[p, pos]; image-row boundaries masked.
    dw = x[:, 1:] - x[:, :-1]                     # (P, chw - 1)
    s_w = jnp.sum(dw * dw * wmask_ref[...])

    if multi_chunk:
        # Cross-chunk H pairs: first image row of this chunk vs. the last
        # image row of the previous chunk (carried in VMEM).
        @pl.when(j > 0)
        def _cross_chunk():
            d = x[:, :w] - carry_ref[...]
            hpart_ref[...] += jnp.sum(d * d)

        carry_ref[...] = x[:, -w:]

    # Tiny lane-dense per-plane-block partial accumulators (1 vreg each).
    hpart_ref[...] += s_h
    wpart_ref[...] += s_w


def tv_loss(x, tv_loss_weight=1.0, *, _block_budget_bytes=None):
    """TV loss matching PyTorch TVLoss.forward. x: (N, C, H, W). Returns scalar f32."""
    n, c, h, w = x.shape
    nc, hw = n * c, h * w
    itemsize = jnp.dtype(x.dtype).itemsize

    p, nc_pad, chw = _plan(nc, h, w, itemsize, _block_budget_bytes)
    nj = hw // chw
    nb = nc_pad // p
    multi_chunk = nj > 1

    x_flat = x.reshape(nc, hw)
    if nc_pad != nc:
        # Zero planes contribute nothing to either sum (diffs never cross planes).
        x_flat = jnp.pad(x_flat, ((0, nc_pad - nc), (0, 0)))

    # 1.0 where a flattened (pos, pos+1) pair stays inside an image row, else 0.
    # Periodic with period W, so one chunk-sized mask serves every chunk.
    col = jnp.arange(chw - 1, dtype=jnp.int32)
    wmask = ((col % w) != (w - 1)).astype(jnp.float32).reshape(1, chw - 1)

    carry_shape = (p, w) if multi_chunk else (8, 128)  # dummy when unused
    vmem_limit = int(min(_vmem_capacity_bytes() * 0.85, 100 * 1024 * 1024))

    h_part, w_part = pl.pallas_call(
        functools.partial(_tv_kernel, w=w, multi_chunk=multi_chunk),
        out_shape=(
            jax.ShapeDtypeStruct((nb, 8, 128), jnp.float32),
            jax.ShapeDtypeStruct((nb, 8, 128), jnp.float32),
        ),
        grid_spec=pltpu.PrefetchScalarGridSpec(
            num_scalar_prefetch=0,
            grid=(nb, nj),
            in_specs=[
                pl.BlockSpec((p, chw), lambda i, j: (i, j)),
                pl.BlockSpec((1, chw - 1), lambda i, j: (0, 0)),
            ],
            out_specs=(
                pl.BlockSpec((1, 8, 128), lambda i, j: (i, 0, 0)),
                pl.BlockSpec((1, 8, 128), lambda i, j: (i, 0, 0)),
            ),
            scratch_shapes=[pltpu.VMEM(carry_shape, jnp.float32)],
        ),
        compiler_params=pltpu.CompilerParams(
            # Plane-block axis has no shared state -> parallel (uses both v7x TCs).
            # HW-chunk axis accumulates into the resident output block -> arbitrary.
            dimension_semantics=("parallel", "arbitrary"),
            vmem_limit_bytes=vmem_limit,
        ),
    )(x_flat, wmask)

    h_tv = jnp.sum(h_part[:, 0, 0])
    w_tv = jnp.sum(w_part[:, 0, 0])
    # TODO(synk): h == 1 or w == 1 divides by zero, exactly like the PyTorch module.
    count_h = c * (h - 1) * w
    count_w = c * h * (w - 1)
    return tv_loss_weight * 2.0 * (h_tv / count_h + w_tv / count_w) / n


def _tv_loss_ref(x, tv_loss_weight=1.0):
    # Pure-JAX reference for the correctness check.
    n, c, h, w = x.shape
    xf = x.astype(jnp.float32)
    h_tv = jnp.sum((xf[:, :, 1:, :] - xf[:, :, :-1, :]) ** 2)
    w_tv = jnp.sum((xf[:, :, :, 1:] - xf[:, :, :, :-1]) ** 2)
    count_h = c * (h - 1) * w
    count_w = c * h * (w - 1)
    return tv_loss_weight * 2.0 * (h_tv / count_h + w_tv / count_w) / n


if __name__ == "__main__":
    key = jax.random.PRNGKey(0)
    k1, k2 = jax.random.split(key)

    # Main case: single-chunk fast path (whole planes per block, parallel grid).
    x = jax.random.normal(k1, (2, 4, 16, 16), dtype=jnp.float32)
    out = jax.block_until_ready(tv_loss(x, tv_loss_weight=1.0))
    ref = _tv_loss_ref(x, tv_loss_weight=1.0)
    assert jnp.allclose(out, ref, rtol=1e-4, atol=1e-4), (out, ref)

    # Exercise the HW-chunked (large-image) fallback by forcing a tiny budget.
    x2 = jax.random.normal(k2, (1, 2, 8, 128), dtype=jnp.float32)
    out2 = jax.block_until_ready(
        tv_loss(x2, tv_loss_weight=0.5, _block_budget_bytes=4096))
    ref2 = _tv_loss_ref(x2, tv_loss_weight=0.5)
    assert jnp.allclose(out2, ref2, rtol=1e-4, atol=1e-4), (out2, ref2)

    print("KERNEL_OK")
</pallas_src>

<mosaic_0001>
module attributes {stable_mosaic.version = 11 : i64} {
  func.func @_tv_kernel(%arg0: i32, %arg1: i32, %arg2: memref<8x256xf32, #tpu.memory_space<vmem>>, %arg3: memref<1x255xf32, #tpu.memory_space<vmem>>, %arg4: memref<1x8x128xf32, #tpu.memory_space<vmem>>, %arg5: memref<1x8x128xf32, #tpu.memory_space<vmem>>, %arg6: memref<8x128xf32, #tpu.memory_space<vmem>>) attributes {dimension_semantics = [#tpu.dimension_semantics<parallel>, #tpu.dimension_semantics<arbitrary>], iteration_bounds = array<i64: 1, 1>, scalar_prefetch = 0 : i64, scratch_operands = 1 : i64, tpu.core_type = #tpu.core_type<tc>, window_params = [{transform_indices = @transform_0, window_bounds = array<i64: 8, 256>}, {pipeline_mode = #tpu.pipeline_mode<synchronous>, transform_indices = @transform_1, window_bounds = array<i64: 1, 255>}, {transform_indices = @transform_2, window_bounds = array<i64: 1, 8, 128>}, {transform_indices = @transform_3, window_bounds = array<i64: 1, 8, 128>}]} {
    %c0_i32 = arith.constant 0 : i32
    %0 = arith.cmpi eq, %arg1, %c0_i32 : i32
    %1 = arith.extui %0 : i1 to i32
    %c0_i32_0 = arith.constant 0 : i32
    %2 = arith.cmpi ne, %1, %c0_i32_0 : i32
    scf.if %2 {
      %cst_17 = arith.constant 0.000000e+00 : f32
      %31 = vector.broadcast %cst_17 : f32 to vector<1x8x128xf32>
      %c0_18 = arith.constant 0 : index
      %c0_19 = arith.constant 0 : index
      %c0_20 = arith.constant 0 : index
      %32 = vector.load %arg4[%c0_18, %c0_19, %c0_20] : memref<1x8x128xf32, #tpu.memory_space<vmem>>, vector<1x8x128xf32>
      tpu.vector_store %arg4[%c0_18, %c0_19, %c0_20], %31 {strides = array<i32>} : memref<1x8x128xf32, #tpu.memory_space<vmem>>, vector<1x8x128xf32>,
      %cst_21 = arith.constant 0.000000e+00 : f32
      %33 = vector.broadcast %cst_21 : f32 to vector<1x8x128xf32>
      %c0_22 = arith.constant 0 : index
      %c0_23 = arith.constant 0 : index
      %c0_24 = arith.constant 0 : index
      %34 = vector.load %arg5[%c0_22, %c0_23, %c0_24] : memref<1x8x128xf32, #tpu.memory_space<vmem>>, vector<1x8x128xf32>
      tpu.vector_store %arg5[%c0_22, %c0_23, %c0_24], %33 {strides = array<i32>} : memref<1x8x128xf32, #tpu.memory_space<vmem>>, vector<1x8x128xf32>,
    } else {
    }
    %c0 = arith.constant 0 : index
    %c0_1 = arith.constant 0 : index
    %3 = vector.load %arg2[%c0, %c0_1] : memref<8x256xf32, #tpu.memory_space<vmem>>, vector<8x256xf32>
    %4 = vector.extract_strided_slice %3 {offsets = [0, 16], sizes = [8, 240], strides = [1, 1]} : vector<8x256xf32> to vector<8x240xf32>
    %5 = vector.extract_strided_slice %3 {offsets = [0, 0], sizes = [8, 240], strides = [1, 1]} : vector<8x256xf32> to vector<8x240xf32>
    %6 = arith.subf %4, %5 : vector<8x240xf32>
    %7 = arith.mulf %6, %6 : vector<8x240xf32>
    %8 = vector.shape_cast %7 : vector<8x240xf32> to vector<1x8x240xf32>
    %cst = arith.constant dense<0.000000e+00> : vector<1xf32>
    %9 = vector.multi_reduction <add>, %8, %cst [1, 2] : vector<1x8x240xf32> to vector<1xf32>
    %10 = vector.shape_cast %9 : vector<1xf32> to vector<1x1x1xf32>
    %11 = vector.extract %10[0, 0, 0] : f32 from vector<1x1x1xf32>
    %12 = vector.extract_strided_slice %3 {offsets = [0, 1], sizes = [8, 255], strides = [1, 1]} : vector<8x256xf32> to vector<8x255xf32>
    %13 = vector.extract_strided_slice %3 {offsets = [0, 0], sizes = [8, 255], strides = [1, 1]} : vector<8x256xf32> to vector<8x255xf32>
    %14 = arith.subf %12, %13 : vector<8x255xf32>
    %15 = arith.mulf %14, %14 : vector<8x255xf32>
    %c0_2 = arith.constant 0 : index
    %c0_3 = arith.constant 0 : index
    %16 = vector.load %arg3[%c0_2, %c0_3] : memref<1x255xf32, #tpu.memory_space<vmem>>, vector<1x255xf32>
    %17 = vector.broadcast %16 : vector<1x255xf32> to vector<8x255xf32>
    %18 = arith.mulf %15, %17 : vector<8x255xf32>
    %19 = vector.shape_cast %18 : vector<8x255xf32> to vector<1x8x255xf32>
    %cst_4 = arith.constant dense<0.000000e+00> : vector<1xf32>
    %20 = vector.multi_reduction <add>, %19, %cst_4 [1, 2] : vector<1x8x255xf32> to vector<1xf32>
    %21 = vector.shape_cast %20 : vector<1xf32> to vector<1x1x1xf32>
    %22 = vector.extract %21[0, 0, 0] : f32 from vector<1x1x1xf32>
    %c0_5 = arith.constant 0 : index
    %c0_6 = arith.constant 0 : index
    %c0_7 = arith.constant 0 : index
    %23 = vector.load %arg4[%c0_5, %c0_6, %c0_7] : memref<1x8x128xf32, #tpu.memory_space<vmem>>, vector<1x8x128xf32>
    %24 = vector.broadcast %11 : f32 to vector<1x8x128xf32>
    %25 = arith.addf %23, %24 : vector<1x8x128xf32>
    %c0_8 = arith.constant 0 : index
    %c0_9 = arith.constant 0 : index
    %c0_10 = arith.constant 0 : index
    %26 = vector.load %arg4[%c0_8, %c0_9, %c0_10] : memref<1x8x128xf32, #tpu.memory_space<vmem>>, vector<1x8x128xf32>
    tpu.vector_store %arg4[%c0_8, %c0_9, %c0_10], %25 {strides = array<i32>} : memref<1x8x128xf32, #tpu.memory_space<vmem>>, vector<1x8x128xf32>,
    %c0_11 = arith.constant 0 : index
    %c0_12 = arith.constant 0 : index
    %c0_13 = arith.constant 0 : index
    %27 = vector.load %arg5[%c0_11, %c0_12, %c0_13] : memref<1x8x128xf32, #tpu.memory_space<vmem>>, vector<1x8x128xf32>
    %28 = vector.broadcast %22 : f32 to vector<1x8x128xf32>
    %29 = arith.addf %27, %28 : vector<1x8x128xf32>
    %c0_14 = arith.constant 0 : index
    %c0_15 = arith.constant 0 : index
    %c0_16 = arith.constant 0 : index
    %30 = vector.load %arg5[%c0_14, %c0_15, %c0_16] : memref<1x8x128xf32, #tpu.memory_space<vmem>>, vector<1x8x128xf32>
    tpu.vector_store %arg5[%c0_14, %c0_15, %c0_16], %29 {strides = array<i32>} : memref<1x8x128xf32, #tpu.memory_space<vmem>>, vector<1x8x128xf32>,
    return
  }
  func.func @transform_0(%arg0: i32, %arg1: i32) -> (i32, i32) {
    %c0_i32 = arith.constant 0 : i32
    return %arg0, %arg1 : i32, i32
  }
  func.func @transform_1(%arg0: i32, %arg1: i32) -> (i32, i32) {
    %c0_i32 = arith.constant 0 : i32
    %c0_i32_0 = arith.constant 0 : i32
    %c0_i32_1 = arith.constant 0 : i32
    return %c0_i32, %c0_i32_0 : i32, i32
  }
  func.func @transform_2(%arg0: i32, %arg1: i32) -> (i32, i32, i32) {
    %c0_i32 = arith.constant 0 : i32
    %c0_i32_0 = arith.constant 0 : i32
    %c0_i32_1 = arith.constant 0 : i32
    return %arg0, %c0_i32, %c0_i32_0 : i32, i32, i32
  }
  func.func @transform_3(%arg0: i32, %arg1: i32) -> (i32, i32, i32) {
    %c0_i32 = arith.constant 0 : i32
    %c0_i32_0 = arith.constant 0 : i32
    %c0_i32_1 = arith.constant 0 : i32
    return %arg0, %c0_i32, %c0_i32_0 : i32, i32, i32
  }
}

</mosaic_0001>

<llo_original>
// kernel: tpu_custom_call.1
$region0: #{tpu_custom_call.1}
  #allocation0 [shape = 'u32[]', space=smem, size = 0x4, offset = 0x4, fixed_abs, tag = 'smem constant byte address 0x4 - core index']
  #allocation1 [shape = 'u32[144,128]{1,0:T(1,128)}', space=vmem, size = 0x12000, scoped, tag = 'internal scratch']
  #allocation2 [shape = 'f32[8,128]{1,0:T(8,128)}', space=vmem, size = 0x1000, scoped, tag = 'scratch operand']
  %s0 = inlined_call_operand.hbm [shape: f32[8,256], index: 0, kind: input, shape index: {}]
  %s1 = inlined_call_operand.vmem [shape: f32[1,255], index: 1, kind: input, shape index: {}]
  %s2 = inlined_call_operand.hbm [shape: f32[1,8,128], index: 2, kind: output, shape index: {0}]
  %s3 = inlined_call_operand.hbm [shape: f32[1,8,128], index: 3, kind: output, shape index: {1}]
  %4 = xla_tuple %s2, %s3
  %s5 = sld [smem:[#allocation0]]
  $region34: #{tpu_custom_call.1} parent=0
    _
  %s7 = ssub.s32 1, %s5
  %s8 = scalar_select 0, %s7, %s5
  $region1: #{tpu_custom_call.1} parent=0
    #allocation3 [shape = 'u8[8192]{0}', space=vmem, size = 0x2000, scoped, tag = 'input window, operand 0, single buffered']
    #allocation4 [shape = 's32[1]{0}', space=sflag, size = 0x4, scoped, tag = 'scoped memory for tpu_custom_call.1']
    #allocation5 [shape = 's32[1]{0}', space=sflag, size = 0x4, scoped, tag = 'scoped memory for tpu_custom_call.1']
    #allocation6 [shape = 'u8[4096]{0}', space=vmem, size = 0x1000, scoped, tag = 'output window, operand 0, single buffered']
    #allocation7 [shape = 'u8[4096]{0}', space=vmem, size = 0x1000, scoped, tag = 'output window, operand 1, single buffered']
    #allocation8 [shape = 's32[1]{0}', space=sflag, size = 0x4, scoped, tag = 'scoped memory for tpu_custom_call.1']
    %9 = vsyncpa [#allocation4], 0
    %10 = vsyncpa [#allocation5], 0
    %11 = vsyncpa [#allocation8], 0
    // Predicated region
    $region2: #{tpu_custom_call.1} parent=1 // pred_check
      _
    $region3: #{tpu_custom_call.1} parent=1 // pred_check_branch
      %13 = sbr.rel (0) target = $region5
    $region4: #{tpu_custom_call.1} parent=1 // pred_region
      %s15 = ssub.s32 256, 256
      %16 = vsyncadd [#allocation4], %s15
      %s18 = sshll.u32 [#allocation3], 4
      %s19 = int_to_ptr.vmem [resolvable:$true] %s18
      %21 = dma.hbm_to_vmem [thread:$0]  %s0, 256, %s19, [#allocation4]
    $region5: #{tpu_custom_call.1} parent=1 // pred_fallthru
      _
    // Predicated region
    $region6: #{tpu_custom_call.1} parent=1 // pred_check
      _
    $region7: #{tpu_custom_call.1} parent=1 // pred_check_branch
      %23 = sbr.rel (0) target = $region9
    $region8: #{tpu_custom_call.1} parent=1 // pred_region
      _
    $region9: #{tpu_custom_call.1} parent=1 // pred_fallthru
      _
    // Predicated region
    $region10: #{tpu_custom_call.1} parent=1 // pred_check
      _
    $region11: #{tpu_custom_call.1} parent=1 // pred_check_branch
      %25 = sbr.rel (0) target = $region13
    $region12: #{tpu_custom_call.1} parent=1 // pred_region
      %26 = dma.done [#allocation4], 256
    $region13: #{tpu_custom_call.1} parent=1 // pred_fallthru
      _
    %p27 = scmp.eq.s32.totalorder 0, 0
    // Predicated region
    $region14: #{tpu_custom_call.1} parent=1 // pred_check
      %p28 = pneg %p27
    $region15: #{tpu_custom_call.1} parent=1 // pred_check_branch
      %30 = sbr.rel (%p28) target = $region17
    $region16: #{tpu_custom_call.1} parent=1 // pred_region
      %31 = vst [vmem:[#allocation6] sm:$0xff] 0.0
      %32 = vst [vmem:[#allocation7] sm:$0xff] 0.0
    $region17: #{tpu_custom_call.1} parent=1 // pred_fallthru
      _
    %v33 = vld [vmem:[#allocation3] sm:$0xff]
    %v34 = vld [vmem:[#allocation3 + $0x8] sm:$0xff]
    %37 = vrot.lane.b32.xlu0 %v33, 16
    %v38 = vpop.permute.xlu0 %37
    %39 = vrot.lane.b32.xlu0 %v34, 16
    %v40 = vpop.permute.xlu0 %39
    %vm41 = vcmask 130048
    %v42 = vsel %vm41, %v38, %v40
    %v45 = vsub.f32 %v33, %v38
    %v46 = vsub.f32 %v34, %v42
    %v47 = vmul.f32 %v45, %v45
    %v48 = vmul.f32 %v46, %v46
    %51 = vrot.lane.b32.xlu0 %v47, 112
    %v52 = vpop.permute.xlu0 %51
    %53 = vrot.lane.b32.xlu0 %v48, 112
    %v54 = vpop.permute.xlu0 %53
    %vm55 = vcmask 916480
    %v56 = vsel %vm55, %v52, %v54
    %v59 = vsel %vm55, %v54, 0.0
    %v60 = vadd.f32 %v56, %v59
    %61 = vadd.xlane.f32.xlu0 %v60
    %v62 = vpop.xlane.xlu0 %61
    %v63 = vrot.slane %v62, 4
    %v64 = vadd.f32 %v62, %v63
    %v65 = vrot.slane %v64, 2
    %v66 = vadd.f32 %v64, %v65
    %v67 = vrot.slane %v66, 1
    %v68 = vadd.f32 %v66, %v67
    %s69 = vtos %v68
    %70 = vrot.lane.b32.xlu0 %v33, 1
    %v71 = vpop.permute.xlu0 %70
    %72 = vrot.lane.b32.xlu0 %v34, 1
    %v73 = vpop.permute.xlu0 %72
    %vm74 = vcmask 7168
    %v75 = vsel %vm74, %v71, %v73
    %v78 = vsub.f32 %v33, %v71
    %v79 = vsub.f32 %v34, %v75
    %v80 = vmul.f32 %v78, %v78
    %v81 = vmul.f32 %v79, %v79
    %v82 = vld [vmem:[%s1] sm:$0x3]
    %v84 = vlaneseq
    %v85 = vshrl.u32 %v84, 7
    %v86 = vsub.s32 0, %v85
    %v87 = vrot.slane %v82, %v86
    %v88 = vlaneseq
    %v89 = vshrl.u32 %v88, 7
    %v90 = vsub.s32 1, %v89
    %v91 = vrot.slane %v82, %v90
    %92 = vrot.lane.b32.xlu0 %v87, 1
    %v93 = vpop.permute.xlu0 %92
    %94 = vrot.lane.b32.xlu0 %v91, 1
    %v95 = vpop.permute.xlu0 %94
    %v96 = vsel %vm74, %v93, %v95
    %v99 = vmul.f32 %v80, %v93
    %v100 = vmul.f32 %v81, %v96
    %103 = vrot.lane.b32.xlu0 %v99, 127
    %v104 = vpop.permute.xlu0 %103
    %105 = vrot.lane.b32.xlu0 %v100, 127
    %v106 = vpop.permute.xlu0 %105
    %vm107 = vcmask 1039360
    %v108 = vsel %vm107, %v104, %v106
    %v111 = vsel %vm107, %v106, 0.0
    %v112 = vadd.f32 %v108, %v111
    %113 = vadd.xlane.f32.xlu0 %v112
    %v114 = vpop.xlane.xlu0 %113
    %v115 = vrot.slane %v114, 4
    %v116 = vadd.f32 %v114, %v115
    %v117 = vrot.slane %v116, 2
    %v118 = vadd.f32 %v116, %v117
    %v119 = vrot.slane %v118, 1
    %v120 = vadd.f32 %v118, %v119
    %s121 = vtos %v120
    %v122 = vld [vmem:[#allocation6] sm:$0xff]
    %v123 = vstv %s69
    %v124 = vadd.f32 %v122, %v123
    %125 = vst [vmem:[#allocation6] sm:$0xff] %v124
    %v126 = vld [vmem:[#allocation7] sm:$0xff]
    %v127 = vstv %s121
    %v128 = vadd.f32 %v126, %v127
    %129 = vst [vmem:[#allocation7] sm:$0xff] %v128
    // Predicated region
    $region18: #{tpu_custom_call.1} parent=1 // pred_check
      _
    $region19: #{tpu_custom_call.1} parent=1 // pred_check_branch
      %131 = sbr.rel (0) target = $region21
    $region20: #{tpu_custom_call.1} parent=1 // pred_region
      %s133 = ssub.s32 128, 128
      %134 = vsyncadd [#allocation5], %s133
      %s136 = sshll.u32 [#allocation6], 4
      %s137 = int_to_ptr.vmem [resolvable:$true] %s136
      %139 = dma.vmem_to_hbm [thread:$0]  %s137, 128, %s2, [#allocation5]
    $region21: #{tpu_custom_call.1} parent=1 // pred_fallthru
      _
    // Predicated region
    $region22: #{tpu_custom_call.1} parent=1 // pred_check
      _
    $region23: #{tpu_custom_call.1} parent=1 // pred_check_branch
      %141 = sbr.rel (0) target = $region25
    $region24: #{tpu_custom_call.1} parent=1 // pred_region
      %s143 = ssub.s32 128, 128
      %144 = vsyncadd [#allocation8], %s143
      %s146 = sshll.u32 [#allocation7], 4
      %s147 = int_to_ptr.vmem [resolvable:$true] %s146
      %149 = dma.vmem_to_hbm [thread:$0]  %s147, 128, %s3, [#allocation8]
    $region25: #{tpu_custom_call.1} parent=1 // pred_fallthru
      _
    // Predicated region
    $region26: #{tpu_custom_call.1} parent=1 // pred_check
      _
    $region27: #{tpu_custom_call.1} parent=1 // pred_check_branch
      %151 = sbr.rel (0) target = $region29
    $region28: #{tpu_custom_call.1} parent=1 // pred_region
      %152 = dma.done [#allocation5], 128
    $region29: #{tpu_custom_call.1} parent=1 // pred_fallthru
      _
    // Predicated region
    $region30: #{tpu_custom_call.1} parent=1 // pred_check
      _
    $region31: #{tpu_custom_call.1} parent=1 // pred_check_branch
      %154 = sbr.rel (0) target = $region33
    $region32: #{tpu_custom_call.1} parent=1 // pred_region
      %155 = dma.done [#allocation8], 128
    $region33: #{tpu_custom_call.1} parent=1 // pred_fallthru
      _
    %156 = vsyncpa [#allocation4], 1
    %157 = vsyncpa [#allocation5], 1
    %158 = vsyncpa [#allocation8], 1

</llo_original>
